<compile_context>
chip_gen: v5e
topology: v5e:2x2
jax: 0.10.0
libtpu: 0.0.40
codegen_flags: <defaults>
</compile_context>

<pallas_src>
import functools
import math

import jax
import jax.numpy as jnp
from jax import lax
from jax.experimental import pallas as pl
from jax.experimental.pallas import tpu as pltpu


def positional_encoding(model_size: int, max_len: int = 500) -> jnp.ndarray:
    """Same table as the PyTorch PositionalEncoding helper (plain-JAX setup)."""
    assert model_size % 2 == 0, "PositionalEncoding requires an even model_size"
    position = jnp.arange(max_len, dtype=jnp.float32)[:, None]        # (L, 1)
    div_term = jnp.exp(
        jnp.arange(0, model_size, 2, dtype=jnp.float32)
        * -(math.log(10000.0) / model_size))                          # (D/2,)
    angles = position * div_term                                      # (L, D/2)
    pe = jnp.zeros((max_len, model_size), dtype=jnp.float32)
    pe = pe.at[:, 0::2].set(jnp.sin(angles))
    pe = pe.at[:, 1::2].set(jnp.cos(angles))
    return pe


def _round_up(x: int, m: int) -> int:
    return ((x + m - 1) // m) * m


def _embeds_kernel(ids_ref, emb_ref, pe_ref, o_ref, *, scale, vocab, use_onehot):
    # ids_ref: (TS, 1) int32    token ids for this block (batch dim squeezed)
    # emb_ref: (V, D)           embedding table, resident (single-buffered)
    # pe_ref:  (TS, D) f32      positional-encoding tile for this block
    # o_ref:   (TS, D)          output tile
    ids_col = ids_ref[...]                                          # (TS, 1)
    if use_onehot:
        # Gather as a one-hot MXU matmul: (TS, V) @ (V, D) -> f32 (TS, D).
        ts = ids_col.shape[0]
        iota_v = lax.broadcasted_iota(jnp.int32, (ts, vocab), 1)    # (TS, V)
        onehot = (ids_col == iota_v).astype(emb_ref.dtype)          # exact 0/1
        gathered = jnp.dot(onehot, emb_ref[...],
                           preferred_element_type=jnp.float32)      # (TS, D)
    else:
        # Vectorized gather on the resident VMEM table (large-vocab fallback).
        gathered = jnp.take(emb_ref[...], ids_col[:, 0],
                            axis=0).astype(jnp.float32)             # (TS, D)

    # sqrt(D) scale + positional add in f32, single cast at the dense store.
    out = gathered * scale + pe_ref[...]
    o_ref[...] = out.astype(o_ref.dtype)


def embeds_forward(x_ids, embed_table, pe_table, *, block_tokens: int = 256,
                   onehot_vocab_limit: int = 4096):
    """Pallas equivalent of Embeds.forward (dropout in eval mode)."""
    B, S = x_ids.shape
    V, D = embed_table.shape
    max_len = pe_table.shape[0]
    assert S <= max_len, "sequence length exceeds positional-encoding max_len"

    scale = math.sqrt(float(D))
    dtype = embed_table.dtype
    itemsize = jnp.dtype(dtype).itemsize

    # Sequence-block tile: multiple of 8, capped at block_tokens (256 suits the
    # 256x256 MXU on v6e/v7x; pass block_tokens=128 on v5e).
    ts = _round_up(min(block_tokens, _round_up(S, 8)), 8)
    num_s_blocks = pl.cdiv(S, ts)
    s_pad = num_s_blocks * ts

    # Bounds-guard ids (PyTorch nn.Embedding would raise on out-of-range ids;
    # here they are clamped) and pad the sequence axis to a multiple of TS.
    ids = jnp.clip(x_ids.astype(jnp.int32), 0, V - 1)
    if s_pad != S:
        ids = jnp.pad(ids, ((0, 0), (0, s_pad - S)))
    ids = ids[:, :, None]                                   # (B, s_pad, 1)

    # Positional-encoding slab covering [0, s_pad), kept in f32 for compute.
    pe_slab = pe_table[: min(s_pad, max_len)].astype(jnp.float32)
    if pe_slab.shape[0] < s_pad:
        pe_slab = jnp.pad(pe_slab, ((0, s_pad - pe_slab.shape[0]), (0, 0)))

    use_onehot = V <= onehot_vocab_limit

    # Generation-aware VMEM budget: single-buffered resident table, streamed
    # (double-buffered) id / PE / output tiles, plus one-hot & f32 temporaries.
    try:
        vmem_cap = int(pltpu.get_tpu_info().vmem_capacity_bytes)
    except Exception:
        vmem_cap = 64 * 1024 * 1024          # conservative (v7x per-TC) default
    table_bytes = V * D * itemsize
    pe_tile_bytes = ts * D * 4
    ids_tile_bytes = ts * 4
    out_tile_bytes = ts * D * itemsize
    onehot_bytes = ts * V * itemsize if use_onehot else 0
    vmem_needed = (table_bytes
                   + 2 * (pe_tile_bytes + ids_tile_bytes + out_tile_bytes)
                   + onehot_bytes + 2 * ts * D * 4 + (2 << 20))
    assert vmem_needed <= int(vmem_cap * 0.85), (
        "embedding table too large for the resident-VMEM gather path; "
        "needs the batched HBM row-DMA variant (see TODO)")
    vmem_limit = int(min(max(vmem_needed, 16 * 1024 * 1024),
                         vmem_cap - (8 << 20)))

    kernel = functools.partial(_embeds_kernel, scale=scale, vocab=V,
                               use_onehot=use_onehot)

    grid_spec = pltpu.PrefetchScalarGridSpec(
        num_scalar_prefetch=0,
        grid=(B, num_s_blocks),
        in_specs=[
            # Token ids: (TS, 1) column per block (batch dim squeezed).
            pl.BlockSpec((None, ts, 1), lambda b, sb: (b, sb, 0)),
            # Embedding table: resident, fetched once, single-buffered.
            pl.BlockSpec((V, D), lambda b, sb: (0, 0),
                         pipeline_mode=pl.Buffered(buffer_count=1)),
            # Positional-encoding tile streamed through the pipeline.
            pl.BlockSpec((ts, D), lambda b, sb: (sb, 0)),
        ],
        # True-shape output; batch dim squeezed -> dense (TS, D) store.
        out_specs=pl.BlockSpec((None, ts, D), lambda b, sb: (b, sb, 0)),
    )

    gather_flops = 2 * B * num_s_blocks * ts * V * D if use_onehot else 0
    cost = pl.CostEstimate(
        flops=int(gather_flops + 2 * B * s_pad * D),
        transcendentals=0,
        bytes_accessed=int(B * s_pad * 4 + table_bytes + s_pad * D * 4
                           + B * S * D * itemsize),
    )

    out = pl.pallas_call(
        kernel,
        out_shape=jax.ShapeDtypeStruct((B, S, D), dtype),
        grid_spec=grid_spec,
        compiler_params=pltpu.CompilerParams(
            dimension_semantics=("parallel", "parallel"),
            vmem_limit_bytes=vmem_limit),
        cost_estimate=cost,
    )(ids, embed_table, pe_slab)

    return out


if __name__ == "__main__":
    # Small shapes consistent with the module: batch=2, seq=8, model_size=128.
    B, S = 2, 8
    MODEL_SIZE = 128
    VOCAB_SIZE = 64
    MAX_LEN = 500

    key = jax.random.PRNGKey(0)
    k_emb, k_ids = jax.random.split(key)

    # Deterministic parameter init (nn.Embedding(vocab_size, model_size) ~ N(0,1)).
    embed_table = jax.random.normal(k_emb, (VOCAB_SIZE, MODEL_SIZE),
                                    dtype=jnp.float32)
    pe_table = positional_encoding(MODEL_SIZE, MAX_LEN)

    x_ids = jax.random.randint(k_ids, (B, S), 0, VOCAB_SIZE, dtype=jnp.int32)

    out = embeds_forward(x_ids, embed_table, pe_table)
    out = jax.block_until_ready(out)

    # Pure-JAX reference for correctness.
    ref = embed_table[x_ids] * math.sqrt(MODEL_SIZE) + pe_table[:S][None, :, :]
    assert out.shape == (B, S, MODEL_SIZE)
    assert jnp.allclose(out, ref, atol=1e-5, rtol=1e-5), \
        float(jnp.max(jnp.abs(out - ref)))

    print("KERNEL_OK")
</pallas_src>

<mosaic_0001>
module attributes {stable_mosaic.version = 11 : i64} {
  func.func @_embeds_kernel(%arg0: i32, %arg1: i32, %arg2: memref<1x8x1xi32, #tpu.memory_space<vmem>>, %arg3: memref<64x128xf32, #tpu.memory_space<vmem>>, %arg4: memref<8x128xf32, #tpu.memory_space<vmem>>, %arg5: memref<1x8x128xf32, #tpu.memory_space<vmem>>) attributes {dimension_semantics = [#tpu.dimension_semantics<parallel>, #tpu.dimension_semantics<parallel>], iteration_bounds = array<i64: 2, 1>, scalar_prefetch = 0 : i64, scratch_operands = 0 : i64, tpu.core_type = #tpu.core_type<tc>, window_params = [{transform_indices = @transform_0, window_bounds = array<i64: 1, 8, 1>}, {pipeline_mode = #tpu.pipeline_mode<synchronous>, transform_indices = @transform_1, window_bounds = array<i64: 64, 128>}, {transform_indices = @transform_2, window_bounds = array<i64: 8, 128>}, {transform_indices = @transform_3, window_bounds = array<i64: 1, 8, 128>}]} {
    %c0 = arith.constant 0 : index
    %c0_0 = arith.constant 0 : index
    %c0_1 = arith.constant 0 : index
    %0 = vector.load %arg2[%c0, %c0_0, %c0_1] : memref<1x8x1xi32, #tpu.memory_space<vmem>>, vector<1x8x1xi32>
    %1 = vector.shape_cast %0 : vector<1x8x1xi32> to vector<8x1xi32>
    %2 = tpu.iota {dimensions = array<i32: 1>} : vector<8x64xi32>
    %3 = vector.broadcast %1 : vector<8x1xi32> to vector<8x64xi32>
    %4 = arith.cmpi eq, %3, %2 : vector<8x64xi32>
    %5 = arith.extui %4 : vector<8x64xi1> to vector<8x64xi32>
    %6 = arith.sitofp %5 : vector<8x64xi32> to vector<8x64xf32>
    %c0_2 = arith.constant 0 : index
    %c0_3 = arith.constant 0 : index
    %7 = vector.load %arg3[%c0_2, %c0_3] : memref<64x128xf32, #tpu.memory_space<vmem>>, vector<64x128xf32>
    %cst = arith.constant dense<0.000000e+00> : vector<8x128xf32>
    %8 = tpu.matmul %6, %7, %cst {dimension_numbers = #tpu.dot_dimension_numbers<[1], [0], [0], [1], [0, 0, 1, 1], [], []>} : vector<8x64xf32>, vector<64x128xf32>, vector<8x128xf32> -> vector<8x128xf32>
    %cst_4 = arith.constant 11.3137083 : f32
    %9 = vector.broadcast %cst_4 : f32 to vector<8x128xf32>
    %10 = arith.mulf %8, %9 : vector<8x128xf32>
    %c0_5 = arith.constant 0 : index
    %c0_6 = arith.constant 0 : index
    %11 = vector.load %arg4[%c0_5, %c0_6] : memref<8x128xf32, #tpu.memory_space<vmem>>, vector<8x128xf32>
    %12 = arith.addf %10, %11 : vector<8x128xf32>
    %c0_7 = arith.constant 0 : index
    %c0_8 = arith.constant 0 : index
    %c0_9 = arith.constant 0 : index
    %13 = vector.load %arg5[%c0_7, %c0_8, %c0_9] : memref<1x8x128xf32, #tpu.memory_space<vmem>>, vector<1x8x128xf32>
    %14 = vector.shape_cast %13 : vector<1x8x128xf32> to vector<8x128xf32>
    %15 = vector.shape_cast %12 : vector<8x128xf32> to vector<1x8x128xf32>
    tpu.vector_store %arg5[%c0_7, %c0_8, %c0_9], %15 {strides = array<i32>} : memref<1x8x128xf32, #tpu.memory_space<vmem>>, vector<1x8x128xf32>,
    return
  }
  func.func @transform_0(%arg0: i32, %arg1: i32) -> (i32, i32, i32) {
    %c0_i32 = arith.constant 0 : i32
    %c0_i32_0 = arith.constant 0 : i32
    return %arg0, %arg1, %c0_i32 : i32, i32, i32
  }
  func.func @transform_1(%arg0: i32, %arg1: i32) -> (i32, i32) {
    %c0_i32 = arith.constant 0 : i32
    %c0_i32_0 = arith.constant 0 : i32
    %c0_i32_1 = arith.constant 0 : i32
    return %c0_i32, %c0_i32_0 : i32, i32
  }
  func.func @transform_2(%arg0: i32, %arg1: i32) -> (i32, i32) {
    %c0_i32 = arith.constant 0 : i32
    %c0_i32_0 = arith.constant 0 : i32
    return %arg1, %c0_i32 : i32, i32
  }
  func.func @transform_3(%arg0: i32, %arg1: i32) -> (i32, i32, i32) {
    %c0_i32 = arith.constant 0 : i32
    %c0_i32_0 = arith.constant 0 : i32
    return %arg0, %arg1, %c0_i32 : i32, i32, i32
  }
}

</mosaic_0001>

<llo_original>
// kernel: tpu_custom_call.1
$region0: #{tpu_custom_call.1}
  #allocation0 [shape = 'u32[]', space=smem, size = 0x4, offset = 0x4, fixed_abs, tag = 'smem constant byte address 0x4 - core index']
  #allocation1 [shape = 'u32[72,128]{1,0:T(1,128)}', space=vmem, size = 0x9000, scoped, tag = 'internal scratch']
  %s0 = inlined_call_operand.vmem [shape: s32[2,8,1], index: 0, kind: input, shape index: {}]
  %s1 = inlined_call_operand.hbm [shape: f32[64,128], index: 1, kind: input, shape index: {}]
  %s2 = inlined_call_operand.vmem [shape: f32[8,128], index: 2, kind: input, shape index: {}]
  %s3 = inlined_call_operand.hbm [shape: f32[2,8,128], index: 3, kind: output, shape index: {}]
  %s4 = sld [smem:[#allocation0]]
  $region49: #{tpu_custom_call.1} parent=0
    _
  %s6 = ssub.s32 1, %s4
  %s7 = scalar_select 0, %s6, %s4
  $region1: #{tpu_custom_call.1} parent=0
    #allocation2 [shape = 'u8[32768]{0}', space=vmem, size = 0x8000, scoped, tag = 'input window, operand 1, single buffered']
    #allocation3 [shape = 's32[2]{0}', space=sflag, size = 0x8, scoped, tag = 'scoped memory for tpu_custom_call.1']
    #allocation4 [shape = 's32[2]{0}', space=sflag, size = 0x8, scoped, tag = 'scoped memory for tpu_custom_call.1']
    #allocation5 [shape = 'u8[8192]{0}', space=vmem, size = 0x2000, scoped, tag = 'output window, operand 0']
    %8 = vsyncpa [#allocation3], 0
    %9 = vsyncpa [#allocation4], 0
    %s10 = scalar_lea.sflag [#allocation4], 1
    %11 = vsyncpa %s10, 0
    loop: start=0, step=1, limit=4
    $region2: #{tpu_custom_call.1} parent=1 // loop_pre_header
      _
    $region3: #{tpu_custom_call.1} parent=1 // loop_header
      %s13 = sphi 0, %s17
      %p14 = scmp.ge.s32.totalorder %s13, 4
      %s20 = sphi 0, %s32
      %s21 = sphi 0, %s28
      %s22 = sphi 0, %s20
      %s23 = sphi 0, %s21
      %s24 = sphi 0, %s22
      %s25 = sphi 0, %s23
      %s37 = sphi 0, %s39
      %s40 = sphi 0, %s37
      %s41 = sphi 0, %s40
      %s57 = sphi 0, %s41
      %s61 = sphi 0, %s61
      %s63 = sphi 0, %s61
      %s64 = sphi 0, %s63
      %s78 = sphi 0, %s64
      %s84 = sphi 0, %s86
      %s87 = sphi 0, %s84
      %s88 = sphi 0, %s87
      %s104 = sphi 0, %s88
      %s112 = sphi 0, %s114
      %s115 = sphi 0, %s112
      %s116 = sphi 0, %s115
      %s132 = sphi 0, %s116
    $region4: #{tpu_custom_call.1} parent=1 // loop_header_branch
      %16 = sbr.rel (%p14) target = $region8
    $region5: #{tpu_custom_call.1} parent=1 // loop_body
      %s18 = ssub.s32 %s13, 1
      %s19 = ssub.s32 %s13, 2
      %s26 = sadd.s32 1, %s21
      %p27 = scmp.ge.s32.totalorder %s26, 1
      %s28 = scalar_select %p27, 0, %s26
      %s29 = sadd.s32 1, %s20
      %s30 = scalar_select %p27, %s29, %s20
      %p31 = scmp.ge.s32.totalorder %s30, 2
      %s32 = scalar_select %p31, 0, %s30
      %s33 = ssub.s32 %s20, %s32
      %s34 = ssub.s32 %s21, %s28
      %s35 = sor.u32 %s33, %s34
      %p36 = scmp.eq.s32.totalorder %s35, 0
      %s38 = sadd.s32 %s37, 1
      %s39 = scalar_select %p36, %s37, %s38
      %p42 = pneg %p36
      %p43 = scmp.eq.s32.totalorder %s13, 1
      %p44 = por %p42, %p43
      %p45 = scmp.ne.s32.totalorder %s37, %s40
      %p46 = scmp.eq.s32.totalorder %s13, 0
      %p47 = por %p45, %p46
      %p48 = scmp.ne.s32.totalorder %s37, %s40
      %p49 = scmp.eq.s32.totalorder %s18, 1
      %p50 = por %p48, %p49
      %p51 = scmp.ne.s32.totalorder %s40, %s41
      %p52 = scmp.eq.s32.totalorder %s18, 0
      %p53 = por %p51, %p52
      %p54 = scmp.ne.s32.totalorder %s40, %s41
      %p55 = scmp.eq.s32.totalorder %s19, 1
      %p56 = por %p54, %p55
      %p58 = scmp.ne.s32.totalorder %s41, %s57
      %p59 = scmp.eq.s32.totalorder %s19, 0
      %p60 = por %p58, %p59
      %s62 = sadd.s32 %s61, 1
      %p65 = scmp.eq.s32.totalorder %s13, 1
      %p66 = scmp.ne.s32.totalorder %s61, %s63
      %p67 = scmp.eq.s32.totalorder %s13, 0
      %p68 = por %p66, %p67
      %p69 = scmp.ne.s32.totalorder %s61, %s63
      %p70 = scmp.eq.s32.totalorder %s18, 1
      %p71 = por %p69, %p70
      %p72 = scmp.ne.s32.totalorder %s63, %s64
      %p73 = scmp.eq.s32.totalorder %s18, 0
      %p74 = por %p72, %p73
      %p75 = scmp.ne.s32.totalorder %s63, %s64
      %p76 = scmp.eq.s32.totalorder %s19, 1
      %p77 = por %p75, %p76
      %p79 = scmp.ne.s32.totalorder %s64, %s78
      %p80 = scmp.eq.s32.totalorder %s19, 0
      %p81 = por %p79, %p80
      %s82 = ssub.s32 %s21, %s28
      %p83 = scmp.eq.s32.totalorder %s82, 0
      %s85 = sadd.s32 %s84, 1
      %s86 = scalar_select %p83, %s84, %s85
      %p89 = pneg %p83
      %p90 = scmp.eq.s32.totalorder %s13, 1
      %p91 = por %p89, %p90
      %p92 = scmp.ne.s32.totalorder %s84, %s87
      %p93 = scmp.eq.s32.totalorder %s13, 0
      %p94 = por %p92, %p93
      %p95 = scmp.ne.s32.totalorder %s84, %s87
      %p96 = scmp.eq.s32.totalorder %s18, 1
      %p97 = por %p95, %p96
      %p98 = scmp.ne.s32.totalorder %s87, %s88
      %p99 = scmp.eq.s32.totalorder %s18, 0
      %p100 = por %p98, %p99
      %p101 = scmp.ne.s32.totalorder %s87, %s88
      %p102 = scmp.eq.s32.totalorder %s19, 1
      %p103 = por %p101, %p102
      %p105 = scmp.ne.s32.totalorder %s88, %s104
      %p106 = scmp.eq.s32.totalorder %s19, 0
      %p107 = por %p105, %p106
      %s108 = ssub.s32 %s20, %s32
      %s109 = ssub.s32 %s21, %s28
      %s110 = sor.u32 %s108, %s109
      %p111 = scmp.eq.s32.totalorder %s110, 0
      %s113 = sadd.s32 %s112, 1
      %s114 = scalar_select %p111, %s112, %s113
      %p117 = pneg %p111
      %p118 = scmp.eq.s32.totalorder %s13, 1
      %p119 = por %p117, %p118
      %p120 = scmp.ne.s32.totalorder %s112, %s115
      %p121 = scmp.eq.s32.totalorder %s13, 0
      %p122 = por %p120, %p121
      %p123 = scmp.ne.s32.totalorder %s112, %s115
      %p124 = scmp.eq.s32.totalorder %s18, 1
      %p125 = por %p123, %p124
      %p126 = scmp.ne.s32.totalorder %s115, %s116
      %p127 = scmp.eq.s32.totalorder %s18, 0
      %p128 = por %p126, %p127
      %p129 = scmp.ne.s32.totalorder %s115, %s116
      %p130 = scmp.eq.s32.totalorder %s19, 1
      %p131 = por %p129, %p130
      %p133 = scmp.ne.s32.totalorder %s116, %s132
      %p134 = scmp.eq.s32.totalorder %s19, 0
      %p135 = por %p133, %p134
      %p136 = scmp.le.s32.totalorder 1, %s13
      %p137 = scmp.lt.s32.totalorder %s13, 3
      %p138 = pnand %p136, %p137
      %p139 = pneg %p138
      // Predicated region
      $region9: #{tpu_custom_call.1} parent=5 // pred_check
        _
      $region10: #{tpu_custom_call.1} parent=5 // pred_check_branch
        %141 = sbr.rel (%p138) target = $region12
      $region11: #{tpu_custom_call.1} parent=5 // pred_region
        %s142 = ssub.s32 %s13, 1
        // Predicated region
        $region13: #{tpu_custom_call.1} parent=11 // pred_check
          %p143 = pneg %p74
        $region14: #{tpu_custom_call.1} parent=11 // pred_check_branch
          %145 = sbr.rel (%p143) target = $region16
        $region15: #{tpu_custom_call.1} parent=11 // pred_region
          %147 = vsyncadd [#allocation3], 0
          %s148 = sshll.u32 %s1, 4
          %s149 = int_to_ptr.hbm [resolvable:$true] %s148
          %s150 = sshll.u32 [#allocation2], 4
          %s151 = int_to_ptr.vmem [resolvable:$true] %s150
          %156 = dma.hbm_to_vmem [thread:$0]  %s149, 1024, %s151, [#allocation3], 128, 128, 8
        $region16: #{tpu_custom_call.1} parent=11 // pred_fallthru
          _
        // Predicated region
        $region17: #{tpu_custom_call.1} parent=11 // pred_check
          %p157 = pneg %p100
        $region18: #{tpu_custom_call.1} parent=11 // pred_check_branch
          %159 = sbr.rel (%p157) target = $region20
        $region19: #{tpu_custom_call.1} parent=11 // pred_region
          %p160 = scmp.lt.s32.totalorder %s23, 0
          %s161 = scalar_select %p160, %s23, 0
          %s162 = smul.addr %s161, 8
          %s163 = scalar_lea.vmem %s2, %s162
        $region20: #{tpu_custom_call.1} parent=11 // pred_fallthru
          _
      $region12: #{tpu_custom_call.1} parent=5 // pred_fallthru
        _
      %p164 = scmp.lt.s32.totalorder %s13, 2
      // Predicated region
      $region21: #{tpu_custom_call.1} parent=5 // pred_check
        %p165 = pneg %p164
      $region22: #{tpu_custom_call.1} parent=5 // pred_check_branch
        %167 = sbr.rel (%p165) target = $region24
      $region23: #{tpu_custom_call.1} parent=5 // pred_region
        // Predicated region
        $region25: #{tpu_custom_call.1} parent=23 // pred_check
          %p168 = pneg %p47
        $region26: #{tpu_custom_call.1} parent=23 // pred_check_branch
          %170 = sbr.rel (%p168) target = $region28
        $region27: #{tpu_custom_call.1} parent=23 // pred_region
          %p171 = scmp.lt.s32.totalorder %s20, 1
          %s172 = scalar_select %p171, %s20, 1
          %p173 = scmp.lt.s32.totalorder %s21, 0
          %s174 = scalar_select %p173, %s21, 0
          %s175 = sadd.s32 %s174, %s172
          %s176 = smul.addr %s175, 8
          %s177 = scalar_lea.vmem %s0, %s176
        $region28: #{tpu_custom_call.1} parent=23 // pred_fallthru
          _
      $region24: #{tpu_custom_call.1} parent=5 // pred_fallthru
        _
      %p178 = scmp.le.s32.totalorder 1, %s13
      %p179 = scmp.lt.s32.totalorder %s13, 3
      %p180 = pnand %p178, %p179
      %p181 = pneg %p180
      // Predicated region
      $region29: #{tpu_custom_call.1} parent=5 // pred_check
        _
      $region30: #{tpu_custom_call.1} parent=5 // pred_check_branch
        %183 = sbr.rel (%p180) target = $region32
      $region31: #{tpu_custom_call.1} parent=5 // pred_region
        %s184 = ssub.s32 %s13, 1
        // Predicated region
        $region33: #{tpu_custom_call.1} parent=31 // pred_check
          %p185 = pneg %p74
        $region34: #{tpu_custom_call.1} parent=31 // pred_check_branch
          %187 = sbr.rel (%p185) target = $region36
        $region35: #{tpu_custom_call.1} parent=31 // pred_region
          %189 = dma.done [#allocation3], 1024
        $region36: #{tpu_custom_call.1} parent=31 // pred_fallthru
          _
        %p190 = scmp.lt.s32.totalorder %s22, 1
        %s191 = scalar_select %p190, %s22, 1
        %p192 = scmp.lt.s32.totalorder %s23, 0
        %s193 = scalar_select %p192, %s23, 0
        %s194 = sadd.s32 %s193, %s191
        %s195 = smul.addr %s194, 8
        %s196 = scalar_lea.vmem %s0, %s195
        %p197 = pneg %p53
        %p198 = pneg %p50
        %p199 = pneg %p74
        %p200 = pneg %p71
        %p201 = scmp.lt.s32.totalorder %s23, 0
        %s202 = scalar_select %p201, %s23, 0
        %s203 = smul.addr %s202, 8
        %s204 = scalar_lea.vmem %s2, %s203
        %p205 = pneg %p100
        %p206 = pneg %p97
        %p207 = pneg %p128
        %p208 = pneg %p125
        %s209 = sand.u32 %s115, 1
        %s210 = scalar_lea.sflag [#allocation4], %s209
        %s211 = sand.u32 %s115, 1
        %s212 = smul.addr %s211, 8
        %s213 = scalar_lea.vmem [#allocation5], %s212
        %p214 = scmp.lt.s32.totalorder %s22, 1
        %s215 = scalar_select %p214, %s22, 1
        %p216 = scmp.lt.s32.totalorder %s23, 0
        %s217 = scalar_select %p216, %s23, 0
        %s218 = sadd.s32 %s217, %s215
        %s219 = smul.addr %s218, 8
        %s220 = scalar_lea.vmem %s0, %s219
        %p221 = scmp.lt.s32.totalorder %s23, 0
        %s222 = scalar_select %p221, %s23, 0
        %s223 = smul.addr %s222, 8
        %s224 = scalar_lea.vmem %s2, %s223
        %v225 = vld [vmem:[%s220] sm:$0xff]
        %v226 = vlaneseq
        %v227 = vand.u32 %v226, 127
        %228 = vset.pattern.permute.xlu0 0
        %229 = vperm.xlu0 %228, %v225
        %v230 = vpop.permute.xlu0 %229
        %vm231 = vcmp.eq.s32.totalorder %v230, %v227
        %v232 = vsel %vm231, 1, 0
        %v233 = vcvt.s32.f32 %v232
        %v234 = vld [vmem:[#allocation2] sm:$0xff]
        %v235 = vld [vmem:[#allocation2 + $0x8] sm:$0xff]
        %v236 = vld [vmem:[#allocation2 + $0x10] sm:$0xff]
        %v237 = vld [vmem:[#allocation2 + $0x18] sm:$0xff]
        %v238 = vld [vmem:[#allocation2 + $0x20] sm:$0xff]
        %v239 = vld [vmem:[#allocation2 + $0x28] sm:$0xff]
        %v240 = vld [vmem:[#allocation2 + $0x30] sm:$0xff]
        %v241 = vld [vmem:[#allocation2 + $0x38] sm:$0xff]
        %vm242 = vcmask 523264
        %v244 = vsel %vm242, %v233, 0
        %246 = vmatpush.msra.mxu0 0.0
        %247 = vmatpush.msra.mxu0 0.0
        %248 = vmatpush.msra.mxu0 0.0
        %249 = vmatpush.msra.mxu0 0.0
        %250 = vmatpush.msra.mxu0 0.0
        %251 = vmatpush.msra.mxu0 0.0
        %252 = vmatpush.msra.mxu0 0.0
        %253 = vmatpush.msra.mxu0 0.0
        %254 = vmatpush.msra.mxu0 %v241
        %255 = vmatpush.msra.mxu0 %v240
        %256 = vmatpush.msra.mxu0 %v239
        %257 = vmatpush.msra.mxu0 %v238
        %258 = vmatpush.msra.mxu0 %v237
        %259 = vmatpush.msra.mxu0 %v236
        %260 = vmatpush.msra.mxu0 %v235
        %261 = vmatpush.msra.mxu0 %v234
        %262 = vmatmul.f32.gmra.mxu0 %v244
        %v263 = vpop.f32.mrf.mxu0
        %v264 = vadd.f32 0.0, %v263
        %265 = vdwg.mxu0
        %v266 = vmul.f32 %v264, 11.313708
        %v267 = vld [vmem:[%s224] sm:$0xff]
        %v268 = vadd.f32 %v266, %v267
        %269 = vst [vmem:[%s213] sm:$0xff] %v268
        %s270 = sand.u32 %s115, 1
        %s271 = scalar_lea.sflag [#allocation4], %s270
        %s272 = sand.u32 %s115, 1
        %s273 = smul.addr %s272, 8
        %s274 = scalar_lea.vmem [#allocation5], %s273
        // Predicated region
        $region37: #{tpu_custom_call.1} parent=31 // pred_check
          %p275 = pneg %p125
        $region38: #{tpu_custom_call.1} parent=31 // pred_check_branch
          %277 = sbr.rel (%p275) target = $region40
        $region39: #{tpu_custom_call.1} parent=31 // pred_region
          %279 = vsyncadd %s271, 0
          %s280 = sadd.s32 %s23, %s22
          %s281 = smul.addr %s280, 8
          %s282 = scalar_lea.hbm %s3, %s281
          %s284 = sshll.u32 %s274, 4
          %s285 = int_to_ptr.vmem [resolvable:$true] %s284
          %s286 = sshll.u32 %s282, 4
          %s287 = int_to_ptr.hbm [resolvable:$true] %s286
          %289 = dma.vmem_to_hbm [thread:$0]  %s285, 128, %s287, %s271
        $region40: #{tpu_custom_call.1} parent=31 // pred_fallthru
          _
      $region32: #{tpu_custom_call.1} parent=5 // pred_fallthru
        _
      %p290 = scmp.le.s32.totalorder 2, %s13
      // Predicated region
      $region41: #{tpu_custom_call.1} parent=5 // pred_check
        %p291 = pneg %p290
      $region42: #{tpu_custom_call.1} parent=5 // pred_check_branch
        %293 = sbr.rel (%p291) target = $region44
      $region43: #{tpu_custom_call.1} parent=5 // pred_region
        %s294 = ssub.s32 %s13, 2
        // Predicated region
        $region45: #{tpu_custom_call.1} parent=43 // pred_check
          %p295 = pneg %p131
        $region46: #{tpu_custom_call.1} parent=43 // pred_check_branch
          %297 = sbr.rel (%p295) target = $region48
        $region47: #{tpu_custom_call.1} parent=43 // pred_region
          %s298 = sand.u32 %s116, 1
          %s299 = scalar_lea.sflag [#allocation4], %s298
          %s300 = sand.u32 %s116, 1
          %s301 = smul.addr %s300, 8
          %s302 = scalar_lea.vmem [#allocation5], %s301
          %304 = dma.done %s299, 128
        $region48: #{tpu_custom_call.1} parent=43 // pred_fallthru
          _
      $region44: #{tpu_custom_call.1} parent=5 // pred_fallthru
        _
    $region6: #{tpu_custom_call.1} parent=1 // loop_footer
      %s17 = sadd.s32 1, %s13
    $region7: #{tpu_custom_call.1} parent=1 // loop_footer_branch
      %12 = sbr.rel target = $region3
    $region8: #{tpu_custom_call.1} parent=1 // loop_exit
      _
    %305 = vsyncpa [#allocation3], 1
    %s306 = scalar_lea.sflag [#allocation3], 1
    %307 = vsyncpa %s306, 1
    %308 = vsyncpa [#allocation4], 1
    %s309 = scalar_lea.sflag [#allocation4], 1
    %310 = vsyncpa %s309, 1

</llo_original>
